<compile_context>
chip_gen: v5e
topology: v5e:2x2
jax: 0.10.0
libtpu: 0.0.40
codegen_flags: <defaults>
</compile_context>

<pallas_src>
import jax
import jax.numpy as jnp
from jax.experimental import pallas as pl
from jax.experimental.pallas import tpu as pltpu

# SELU constants (same as torch.nn.functional.selu)
_SELU_ALPHA = 1.6732632423543772
_SELU_SCALE = 1.0507009873554805

_NEG_BIG = -1e30  # mask value for padded lanes (pre-softmax); f32-safe


def _round_up(v, m):
    return ((v + m - 1) // m) * m


def _selu(x):
    x = x.astype(jnp.float32)
    # Clamp the exp argument: the positive branch of `where` is discarded but
    # still evaluated; clamping avoids generating inf on the EUP path.
    return _SELU_SCALE * jnp.where(
        x > 0.0, x, _SELU_ALPHA * (jnp.exp(jnp.minimum(x, 0.0)) - 1.0)
    )


def _make_net2_kernel(out_size, compute_dtype):
    def net2_kernel(x_ref, w1_ref, b1_ref, w2_ref, b2_ref, w3_ref, b3_ref, o_ref):
        # In-kernel cast (free VPU op). Keeps the HBM-side x traffic at the
        # caller's dtype instead of adding a wrapper-side cast pass over x.
        x = x_ref[...].astype(compute_dtype)

        # fc1 -> SELU  (f32 MXU accumulation, f32 bias add / activation)
        h = jnp.dot(x, w1_ref[...], preferred_element_type=jnp.float32)
        h = _selu(h + b1_ref[...]).astype(compute_dtype)

        # fc2 -> SELU
        h = jnp.dot(h, w2_ref[...], preferred_element_type=jnp.float32)
        h = _selu(h + b2_ref[...]).astype(compute_dtype)

        # fc5 -> SELU   (computed into a lane-dense 128-wide slab)
        h = jnp.dot(h, w3_ref[...], preferred_element_type=jnp.float32)
        h = _selu(h + b3_ref[...])  # f32, shape (tb, out_pad)

        # Mask padded lanes so they cannot perturb max / logsumexp.
        col = jax.lax.broadcasted_iota(jnp.int32, h.shape, dimension=1)
        h = jnp.where(col < out_size, h, _NEG_BIG)

        # log_softmax over the feature dim (== dim=1 of the 2-D activation)
        m = jnp.max(h, axis=-1, keepdims=True)
        z = h - m
        lse = jnp.log(jnp.sum(jnp.exp(z), axis=-1, keepdims=True))

        # Store only the real output columns (narrow, non-padded writeback).
        o_ref[...] = (z - lse)[:, :out_size].astype(o_ref.dtype)

    return net2_kernel


def net2_forward(x, params, *, tb=None, use_bf16=False, out_dtype=jnp.float32):
    """x: (B, INPUT_SHAPE). params: dict of transposed weights/biases.

    tb:        batch tile (rows per grid step). Default: split the batch into
               n_steps = max(2, ceil(rows/4096)) tiles (multiple of 8) so the
               per-step overhead is amortized and v7x megacore gets >= 2 steps.
    use_bf16:  run the matmuls in bf16 (in-kernel cast of x; weights pre-cast).
               Accumulation, biases, SELU and softmax stay f32. Default f32.
    out_dtype: output dtype (f32 default; bf16 halves writeback further).
    """
    w1, b1, w2, b2, w3, b3 = (
        params["w1"], params["b1"], params["w2"],
        params["b2"], params["w3"], params["b3"],
    )
    B, f_in = x.shape
    out_size = w3.shape[1]
    out_pad = _round_up(max(out_size, 128), 128)  # lane-dense compute width

    # ---- batch tiling -------------------------------------------------------
    if tb is None:
        rows = _round_up(B, 8)
        if rows <= 8:
            tb = 8
        else:
            # Cap the tile around 4096 rows (amortizes per-step overhead, well
            # inside VMEM) and use >= 2 grid steps so both v7x TCs get work.
            n_steps = max(2, pl.cdiv(rows, 4096))
            tb = _round_up(pl.cdiv(rows, n_steps), 8)
    tb = max(8, _round_up(tb, 8))
    b_pad = _round_up(B, tb)
    if b_pad != B:
        x = jnp.pad(x, ((0, b_pad - B), (0, 0)))
    grid = (b_pad // tb,)

    # ---- pad final layer to 128 compute lanes --------------------------------
    w3p = jnp.pad(w3, ((0, 0), (0, out_pad - out_size)))
    b3p = jnp.pad(b3, ((0, 0), (0, out_pad - out_size)))

    compute_dtype = jnp.bfloat16 if use_bf16 else jnp.float32
    # NOTE: x is NOT cast in the wrapper (avoids an extra HBM pass); the cast
    # happens in-kernel. Weights/biases are tiny -> pre-cast is fine.
    w1c = w1.astype(compute_dtype)
    w2c = w2.astype(compute_dtype)
    w3c = w3p.astype(compute_dtype)
    b1c = b1.astype(jnp.float32)
    b2c = b2.astype(jnp.float32)
    b3c = b3p.astype(jnp.float32)

    # Resident operands: constant index_map -> fetched once, stay in VMEM.
    resident = lambda arr: pl.BlockSpec(arr.shape, lambda i: (0,) * arr.ndim)

    # ---- VMEM budget (only override scoped default when clearly needed) -----
    itemsize_x = jnp.dtype(x.dtype).itemsize
    est_vmem = (
        2 * tb * f_in * itemsize_x            # double-buffered x tile
        + 2 * tb * out_size * jnp.dtype(out_dtype).itemsize  # double-buffered out
        + tb * (64 + 32 + 2 * out_pad) * 4    # f32 intermediates (with margin)
    )
    vmem_limit = None
    if est_vmem > 30 * 1024 * 1024:
        vmem_limit = min(int(est_vmem * 3 // 2), 100 * 1024 * 1024)

    # ---- cost estimate (mem-bound custom call hint for XLA) -----------------
    flops = 2 * b_pad * (f_in * 64 + 64 * 32 + 32 * out_pad)
    transcendentals = b_pad * (64 + 32 + out_pad + out_pad + 1)  # SELU exps + softmax exp/log
    weight_bytes = sum(
        a.size * jnp.dtype(a.dtype).itemsize
        for a in (w1c, b1c, w2c, b2c, w3c, b3c)
    )
    bytes_accessed = (
        b_pad * f_in * itemsize_x
        + weight_bytes
        + b_pad * out_size * jnp.dtype(out_dtype).itemsize
    )

    out = pl.pallas_call(
        _make_net2_kernel(out_size, compute_dtype),
        out_shape=jax.ShapeDtypeStruct((b_pad, out_size), out_dtype),
        grid=grid,
        in_specs=[
            pl.BlockSpec((tb, f_in), lambda i: (i, 0)),   # x: tiled over batch
            resident(w1c), resident(b1c),                 # weights/biases stay
            resident(w2c), resident(b2c),                 # resident in VMEM
            resident(w3c), resident(b3c),
        ],
        # Narrow writeback: last block dim equals the full array dim (legal)
        # -> only OUTPUT_SIZE columns ever hit HBM.
        out_specs=pl.BlockSpec((tb, out_size), lambda i: (i, 0)),
        compiler_params=pltpu.CompilerParams(
            dimension_semantics=("parallel",),            # megacore on v7x
            vmem_limit_bytes=vmem_limit),
        cost_estimate=pl.CostEstimate(
            flops=int(flops),
            transcendentals=int(transcendentals),
            bytes_accessed=int(bytes_accessed)),
    )(x, w1c, b1c, w2c, b2c, w3c, b3c)

    return out[:B, :]


def init_params(key, input_shape, output_size):
    """Deterministic synthetic parameters, stored already transposed (in, out)."""
    ks = jax.random.split(key, 6)

    def uniform_like_torch(k, fan_in, shape):
        bound = 1.0 / jnp.sqrt(fan_in)
        return jax.random.uniform(k, shape, jnp.float32, -bound, bound)

    return {
        # fc1: (INPUT_SHAPE -> 64)
        "w1": uniform_like_torch(ks[0], input_shape, (input_shape, 64)),
        "b1": uniform_like_torch(ks[1], input_shape, (1, 64)),
        # fc2: (64 -> 32)
        "w2": uniform_like_torch(ks[2], 64, (64, 32)),
        "b2": uniform_like_torch(ks[3], 64, (1, 32)),
        # fc5: (32 -> OUTPUT_SIZE)
        "w3": uniform_like_torch(ks[4], 32, (32, output_size)),
        "b3": uniform_like_torch(ks[5], 32, (1, output_size)),
    }


def net2_reference(x, params):
    """Plain-JAX reference for correctness checking."""
    h = _selu(x @ params["w1"] + params["b1"])
    h = _selu(h @ params["w2"] + params["b2"])
    h = _selu(h @ params["w3"] + params["b3"])
    return jax.nn.log_softmax(h, axis=1)


if __name__ == "__main__":
    key = jax.random.PRNGKey(0)
    kx, kp, kx2 = jax.random.split(key, 3)

    BATCH = 8
    INPUT_SHAPE = 32
    OUTPUT_SIZE = 10

    params = init_params(kp, INPUT_SHAPE, OUTPUT_SIZE)

    # Small check (single grid step).
    x = jax.random.normal(kx, (BATCH, INPUT_SHAPE), jnp.float32)
    out = jax.block_until_ready(net2_forward(x, params))
    ref = net2_reference(x, params)
    assert out.shape == (BATCH, OUTPUT_SIZE)
    assert jnp.allclose(out, ref, atol=1e-5, rtol=1e-5), "mismatch vs reference (small)"

    # Non-multiple batch with the default tiling -> 2-step grid (megacore
    # split) + batch padding + narrow output writeback.
    x2 = jax.random.normal(kx2, (300, INPUT_SHAPE), jnp.float32)
    out2 = jax.block_until_ready(net2_forward(x2, params))
    ref2 = net2_reference(x2, params)
    assert out2.shape == (300, OUTPUT_SIZE)
    assert jnp.allclose(out2, ref2, atol=1e-5, rtol=1e-5), "mismatch vs reference (default tiling)"

    # Explicit small tile -> multi-step grid (3 tiles of 128 rows).
    out3 = jax.block_until_ready(net2_forward(x2, params, tb=128))
    assert out3.shape == (300, OUTPUT_SIZE)
    assert jnp.allclose(out3, ref2, atol=1e-5, rtol=1e-5), "mismatch vs reference (tb=128)"

    print("KERNEL_OK")
</pallas_src>

<mosaic_0001>
module attributes {stable_mosaic.version = 11 : i64} {
  func.func @net2_kernel(%arg0: i32, %arg1: memref<8x32xf32, #tpu.memory_space<vmem>>, %arg2: memref<32x64xf32, #tpu.memory_space<vmem>>, %arg3: memref<1x64xf32, #tpu.memory_space<vmem>>, %arg4: memref<64x32xf32, #tpu.memory_space<vmem>>, %arg5: memref<1x32xf32, #tpu.memory_space<vmem>>, %arg6: memref<32x128xf32, #tpu.memory_space<vmem>>, %arg7: memref<1x128xf32, #tpu.memory_space<vmem>>, %arg8: memref<8x10xf32, #tpu.memory_space<vmem>>) attributes {dimension_semantics = [#tpu.dimension_semantics<parallel>], iteration_bounds = array<i64: 1>, scalar_prefetch = 0 : i64, scratch_operands = 0 : i64, tpu.core_type = #tpu.core_type<tc>, window_params = [{transform_indices = @transform_0, window_bounds = array<i64: 8, 32>}, {pipeline_mode = #tpu.pipeline_mode<synchronous>, transform_indices = @transform_1, window_bounds = array<i64: 32, 64>}, {pipeline_mode = #tpu.pipeline_mode<synchronous>, transform_indices = @transform_2, window_bounds = array<i64: 1, 64>}, {pipeline_mode = #tpu.pipeline_mode<synchronous>, transform_indices = @transform_3, window_bounds = array<i64: 64, 32>}, {pipeline_mode = #tpu.pipeline_mode<synchronous>, transform_indices = @transform_4, window_bounds = array<i64: 1, 32>}, {pipeline_mode = #tpu.pipeline_mode<synchronous>, transform_indices = @transform_5, window_bounds = array<i64: 32, 128>}, {pipeline_mode = #tpu.pipeline_mode<synchronous>, transform_indices = @transform_6, window_bounds = array<i64: 1, 128>}, {transform_indices = @transform_7, window_bounds = array<i64: 8, 10>}]} {
    %c0 = arith.constant 0 : index
    %c0_0 = arith.constant 0 : index
    %0 = vector.load %arg1[%c0, %c0_0] : memref<8x32xf32, #tpu.memory_space<vmem>>, vector<8x32xf32>
    %c0_1 = arith.constant 0 : index
    %c0_2 = arith.constant 0 : index
    %1 = vector.load %arg2[%c0_1, %c0_2] : memref<32x64xf32, #tpu.memory_space<vmem>>, vector<32x64xf32>
    %cst = arith.constant dense<0.000000e+00> : vector<8x64xf32>
    %2 = tpu.matmul %0, %1, %cst {dimension_numbers = #tpu.dot_dimension_numbers<[1], [0], [0], [1], [0, 0, 1, 1], [], []>} : vector<8x32xf32>, vector<32x64xf32>, vector<8x64xf32> -> vector<8x64xf32>
    %c0_3 = arith.constant 0 : index
    %c0_4 = arith.constant 0 : index
    %3 = vector.load %arg3[%c0_3, %c0_4] : memref<1x64xf32, #tpu.memory_space<vmem>>, vector<1x64xf32>
    %4 = vector.broadcast %3 : vector<1x64xf32> to vector<8x64xf32>
    %5 = arith.addf %2, %4 : vector<8x64xf32>
    %cst_5 = arith.constant 0.000000e+00 : f32
    %6 = vector.broadcast %cst_5 : f32 to vector<8x64xf32>
    %7 = arith.cmpf ogt, %5, %6 : vector<8x64xf32>
    %cst_6 = arith.constant 0.000000e+00 : f32
    %8 = vector.broadcast %cst_6 : f32 to vector<8x64xf32>
    %9 = arith.minimumf %5, %8 : vector<8x64xf32>
    %10 = math.exp %9 : vector<8x64xf32>
    %cst_7 = arith.constant 1.000000e+00 : f32
    %11 = vector.broadcast %cst_7 : f32 to vector<8x64xf32>
    %12 = arith.subf %10, %11 : vector<8x64xf32>
    %cst_8 = arith.constant 1.67326319 : f32
    %13 = vector.broadcast %cst_8 : f32 to vector<8x64xf32>
    %14 = arith.mulf %13, %12 : vector<8x64xf32>
    %15 = arith.select %7, %5, %14 : vector<8x64xi1>, vector<8x64xf32>
    %cst_9 = arith.constant 1.05070102 : f32
    %16 = vector.broadcast %cst_9 : f32 to vector<8x64xf32>
    %17 = arith.mulf %16, %15 : vector<8x64xf32>
    %c0_10 = arith.constant 0 : index
    %c0_11 = arith.constant 0 : index
    %18 = vector.load %arg4[%c0_10, %c0_11] : memref<64x32xf32, #tpu.memory_space<vmem>>, vector<64x32xf32>
    %cst_12 = arith.constant dense<0.000000e+00> : vector<8x32xf32>
    %19 = tpu.matmul %17, %18, %cst_12 {dimension_numbers = #tpu.dot_dimension_numbers<[1], [0], [0], [1], [0, 0, 1, 1], [], []>} : vector<8x64xf32>, vector<64x32xf32>, vector<8x32xf32> -> vector<8x32xf32>
    %c0_13 = arith.constant 0 : index
    %c0_14 = arith.constant 0 : index
    %20 = vector.load %arg5[%c0_13, %c0_14] : memref<1x32xf32, #tpu.memory_space<vmem>>, vector<1x32xf32>
    %21 = vector.broadcast %20 : vector<1x32xf32> to vector<8x32xf32>
    %22 = arith.addf %19, %21 : vector<8x32xf32>
    %cst_15 = arith.constant 0.000000e+00 : f32
    %23 = vector.broadcast %cst_15 : f32 to vector<8x32xf32>
    %24 = arith.cmpf ogt, %22, %23 : vector<8x32xf32>
    %cst_16 = arith.constant 0.000000e+00 : f32
    %25 = vector.broadcast %cst_16 : f32 to vector<8x32xf32>
    %26 = arith.minimumf %22, %25 : vector<8x32xf32>
    %27 = math.exp %26 : vector<8x32xf32>
    %cst_17 = arith.constant 1.000000e+00 : f32
    %28 = vector.broadcast %cst_17 : f32 to vector<8x32xf32>
    %29 = arith.subf %27, %28 : vector<8x32xf32>
    %cst_18 = arith.constant 1.67326319 : f32
    %30 = vector.broadcast %cst_18 : f32 to vector<8x32xf32>
    %31 = arith.mulf %30, %29 : vector<8x32xf32>
    %32 = arith.select %24, %22, %31 : vector<8x32xi1>, vector<8x32xf32>
    %cst_19 = arith.constant 1.05070102 : f32
    %33 = vector.broadcast %cst_19 : f32 to vector<8x32xf32>
    %34 = arith.mulf %33, %32 : vector<8x32xf32>
    %c0_20 = arith.constant 0 : index
    %c0_21 = arith.constant 0 : index
    %35 = vector.load %arg6[%c0_20, %c0_21] : memref<32x128xf32, #tpu.memory_space<vmem>>, vector<32x128xf32>
    %cst_22 = arith.constant dense<0.000000e+00> : vector<8x128xf32>
    %36 = tpu.matmul %34, %35, %cst_22 {dimension_numbers = #tpu.dot_dimension_numbers<[1], [0], [0], [1], [0, 0, 1, 1], [], []>} : vector<8x32xf32>, vector<32x128xf32>, vector<8x128xf32> -> vector<8x128xf32>
    %c0_23 = arith.constant 0 : index
    %c0_24 = arith.constant 0 : index
    %37 = vector.load %arg7[%c0_23, %c0_24] : memref<1x128xf32, #tpu.memory_space<vmem>>, vector<1x128xf32>
    %38 = vector.broadcast %37 : vector<1x128xf32> to vector<8x128xf32>
    %39 = arith.addf %36, %38 : vector<8x128xf32>
    %cst_25 = arith.constant 0.000000e+00 : f32
    %40 = vector.broadcast %cst_25 : f32 to vector<8x128xf32>
    %41 = arith.cmpf ogt, %39, %40 : vector<8x128xf32>
    %cst_26 = arith.constant 0.000000e+00 : f32
    %42 = vector.broadcast %cst_26 : f32 to vector<8x128xf32>
    %43 = arith.minimumf %39, %42 : vector<8x128xf32>
    %44 = math.exp %43 : vector<8x128xf32>
    %cst_27 = arith.constant 1.000000e+00 : f32
    %45 = vector.broadcast %cst_27 : f32 to vector<8x128xf32>
    %46 = arith.subf %44, %45 : vector<8x128xf32>
    %cst_28 = arith.constant 1.67326319 : f32
    %47 = vector.broadcast %cst_28 : f32 to vector<8x128xf32>
    %48 = arith.mulf %47, %46 : vector<8x128xf32>
    %49 = arith.select %41, %39, %48 : vector<8x128xi1>, vector<8x128xf32>
    %cst_29 = arith.constant 1.05070102 : f32
    %50 = vector.broadcast %cst_29 : f32 to vector<8x128xf32>
    %51 = arith.mulf %50, %49 : vector<8x128xf32>
    %52 = tpu.iota {dimensions = array<i32: 1>} : vector<8x128xi32>
    %c10_i32 = arith.constant 10 : i32
    %53 = vector.broadcast %c10_i32 : i32 to vector<8x128xi32>
    %54 = arith.cmpi slt, %52, %53 : vector<8x128xi32>
    %cst_30 = arith.constant -1.000000e+30 : f32
    %55 = vector.broadcast %cst_30 : f32 to vector<8x128xf32>
    %56 = arith.select %54, %51, %55 : vector<8x128xi1>, vector<8x128xf32>
    %cst_31 = arith.constant dense<0xFF800000> : vector<8xf32>
    %57 = vector.multi_reduction <maximumf>, %56, %cst_31 [1] : vector<8x128xf32> to vector<8xf32>
    %58 = vector.shape_cast %57 : vector<8xf32> to vector<8x1xf32>
    %59 = vector.broadcast %58 : vector<8x1xf32> to vector<8x128xf32>
    %60 = arith.subf %56, %59 : vector<8x128xf32>
    %61 = math.exp %60 : vector<8x128xf32>
    %cst_32 = arith.constant dense<0.000000e+00> : vector<8xf32>
    %62 = vector.multi_reduction <add>, %61, %cst_32 [1] : vector<8x128xf32> to vector<8xf32>
    %63 = vector.shape_cast %62 : vector<8xf32> to vector<8x1xf32>
    %64 = math.log %63 : vector<8x1xf32>
    %65 = vector.broadcast %64 : vector<8x1xf32> to vector<8x128xf32>
    %66 = arith.subf %60, %65 : vector<8x128xf32>
    %67 = vector.extract_strided_slice %66 {offsets = [0, 0], sizes = [8, 10], strides = [1, 1]} : vector<8x128xf32> to vector<8x10xf32>
    %c0_33 = arith.constant 0 : index
    %c0_34 = arith.constant 0 : index
    %68 = vector.load %arg8[%c0_33, %c0_34] : memref<8x10xf32, #tpu.memory_space<vmem>>, vector<8x10xf32>
    tpu.vector_store %arg8[%c0_33, %c0_34], %67 {strides = array<i32>} : memref<8x10xf32, #tpu.memory_space<vmem>>, vector<8x10xf32>,
    return
  }
  func.func @transform_0(%arg0: i32) -> (i32, i32) {
    %c0_i32 = arith.constant 0 : i32
    %c0_i32_0 = arith.constant 0 : i32
    return %arg0, %c0_i32 : i32, i32
  }
  func.func @transform_1(%arg0: i32) -> (i32, i32) {
    %c0_i32 = arith.constant 0 : i32
    %c0_i32_0 = arith.constant 0 : i32
    %c0_i32_1 = arith.constant 0 : i32
    return %c0_i32, %c0_i32_0 : i32, i32
  }
  func.func @transform_2(%arg0: i32) -> (i32, i32) {
    %c0_i32 = arith.constant 0 : i32
    %c0_i32_0 = arith.constant 0 : i32
    %c0_i32_1 = arith.constant 0 : i32
    return %c0_i32, %c0_i32_0 : i32, i32
  }
  func.func @transform_3(%arg0: i32) -> (i32, i32) {
    %c0_i32 = arith.constant 0 : i32
    %c0_i32_0 = arith.constant 0 : i32
    %c0_i32_1 = arith.constant 0 : i32
    return %c0_i32, %c0_i32_0 : i32, i32
  }
  func.func @transform_4(%arg0: i32) -> (i32, i32) {
    %c0_i32 = arith.constant 0 : i32
    %c0_i32_0 = arith.constant 0 : i32
    %c0_i32_1 = arith.constant 0 : i32
    return %c0_i32, %c0_i32_0 : i32, i32
  }
  func.func @transform_5(%arg0: i32) -> (i32, i32) {
    %c0_i32 = arith.constant 0 : i32
    %c0_i32_0 = arith.constant 0 : i32
    %c0_i32_1 = arith.constant 0 : i32
    return %c0_i32, %c0_i32_0 : i32, i32
  }
  func.func @transform_6(%arg0: i32) -> (i32, i32) {
    %c0_i32 = arith.constant 0 : i32
    %c0_i32_0 = arith.constant 0 : i32
    %c0_i32_1 = arith.constant 0 : i32
    return %c0_i32, %c0_i32_0 : i32, i32
  }
  func.func @transform_7(%arg0: i32) -> (i32, i32) {
    %c0_i32 = arith.constant 0 : i32
    %c0_i32_0 = arith.constant 0 : i32
    return %arg0, %c0_i32 : i32, i32
  }
}

</mosaic_0001>

<llo_original>
// kernel: tpu_custom_call.1
$region0: #{tpu_custom_call.1}
  #allocation0 [shape = 'u32[]', space=smem, size = 0x4, offset = 0x4, fixed_abs, tag = 'smem constant byte address 0x4 - core index']
  #allocation1 [shape = 'u32[72,128]{1,0:T(1,128)}', space=vmem, size = 0x9000, scoped, tag = 'internal scratch']
  %s0 = inlined_call_operand.vmem [shape: f32[8,32], index: 0, kind: input, shape index: {}]
  %s1 = inlined_call_operand.vmem [shape: f32[32,64], index: 1, kind: input, shape index: {}]
  %s2 = inlined_call_operand.vmem [shape: f32[1,64], index: 2, kind: input, shape index: {}]
  %s3 = inlined_call_operand.vmem [shape: f32[64,32], index: 3, kind: input, shape index: {}]
  %s4 = inlined_call_operand.vmem [shape: f32[1,32], index: 4, kind: input, shape index: {}]
  %s5 = inlined_call_operand.vmem [shape: f32[32,128], index: 5, kind: input, shape index: {}]
  %s6 = inlined_call_operand.vmem [shape: f32[1,128], index: 6, kind: input, shape index: {}]
  %s7 = inlined_call_operand.hbm [shape: f32[8,10], index: 7, kind: output, shape index: {}]
  %s8 = sld [smem:[#allocation0]]
  $region38: #{tpu_custom_call.1} parent=0
    _
  %s10 = ssub.s32 1, %s8
  %s11 = scalar_select 0, %s10, %s8
  $region1: #{tpu_custom_call.1} parent=0
    #allocation2 [shape = 'u8[4096]{0}', space=vmem, size = 0x1000, scoped, tag = 'output window, operand 0, single buffered']
    #allocation3 [shape = 's32[1]{0}', space=sflag, size = 0x4, scoped, tag = 'scoped memory for tpu_custom_call.1']
    %12 = vsyncpa [#allocation3], 0
    // Predicated region
    $region2: #{tpu_custom_call.1} parent=1 // pred_check
      _
    $region3: #{tpu_custom_call.1} parent=1 // pred_check_branch
      %14 = sbr.rel (0) target = $region5
    $region4: #{tpu_custom_call.1} parent=1 // pred_region
      _
    $region5: #{tpu_custom_call.1} parent=1 // pred_fallthru
      _
    // Predicated region
    $region6: #{tpu_custom_call.1} parent=1 // pred_check
      _
    $region7: #{tpu_custom_call.1} parent=1 // pred_check_branch
      %16 = sbr.rel (0) target = $region9
    $region8: #{tpu_custom_call.1} parent=1 // pred_region
      _
    $region9: #{tpu_custom_call.1} parent=1 // pred_fallthru
      _
    // Predicated region
    $region10: #{tpu_custom_call.1} parent=1 // pred_check
      _
    $region11: #{tpu_custom_call.1} parent=1 // pred_check_branch
      %18 = sbr.rel (0) target = $region13
    $region12: #{tpu_custom_call.1} parent=1 // pred_region
      _
    $region13: #{tpu_custom_call.1} parent=1 // pred_fallthru
      _
    // Predicated region
    $region14: #{tpu_custom_call.1} parent=1 // pred_check
      _
    $region15: #{tpu_custom_call.1} parent=1 // pred_check_branch
      %20 = sbr.rel (0) target = $region17
    $region16: #{tpu_custom_call.1} parent=1 // pred_region
      _
    $region17: #{tpu_custom_call.1} parent=1 // pred_fallthru
      _
    // Predicated region
    $region18: #{tpu_custom_call.1} parent=1 // pred_check
      _
    $region19: #{tpu_custom_call.1} parent=1 // pred_check_branch
      %22 = sbr.rel (0) target = $region21
    $region20: #{tpu_custom_call.1} parent=1 // pred_region
      _
    $region21: #{tpu_custom_call.1} parent=1 // pred_fallthru
      _
    // Predicated region
    $region22: #{tpu_custom_call.1} parent=1 // pred_check
      _
    $region23: #{tpu_custom_call.1} parent=1 // pred_check_branch
      %24 = sbr.rel (0) target = $region25
    $region24: #{tpu_custom_call.1} parent=1 // pred_region
      _
    $region25: #{tpu_custom_call.1} parent=1 // pred_fallthru
      _
    // Predicated region
    $region26: #{tpu_custom_call.1} parent=1 // pred_check
      _
    $region27: #{tpu_custom_call.1} parent=1 // pred_check_branch
      %26 = sbr.rel (0) target = $region29
    $region28: #{tpu_custom_call.1} parent=1 // pred_region
      _
    $region29: #{tpu_custom_call.1} parent=1 // pred_fallthru
      _
    %v27 = vld [vmem:[%s0] sm:$0xff]
    %v28 = vld [vmem:[%s1] sm:$0xff]
    %v29 = vld [vmem:[%s1 + $0x8] sm:$0xff]
    %v30 = vld [vmem:[%s1 + $0x10] sm:$0xff]
    %v31 = vld [vmem:[%s1 + $0x18] sm:$0xff]
    %v32 = vld [vmem:[%s2] sm:$0x1]
    %v34 = vperm.slane %v32, 0
    %vm36 = vcmask 261120
    %v38 = vsel %vm36, %v27, 0
    %40 = vmatpush.msra.mxu0 0.0
    %41 = vmatpush.msra.mxu0 0.0
    %42 = vmatpush.msra.mxu0 0.0
    %43 = vmatpush.msra.mxu0 0.0
    %44 = vmatpush.msra.mxu0 0.0
    %45 = vmatpush.msra.mxu0 0.0
    %46 = vmatpush.msra.mxu0 0.0
    %47 = vmatpush.msra.mxu0 0.0
    %48 = vmatpush.msra.mxu0 0.0
    %49 = vmatpush.msra.mxu0 0.0
    %50 = vmatpush.msra.mxu0 0.0
    %51 = vmatpush.msra.mxu0 0.0
    %52 = vmatpush.msra.mxu0 %v31
    %53 = vmatpush.msra.mxu0 %v30
    %54 = vmatpush.msra.mxu0 %v29
    %55 = vmatpush.msra.mxu0 %v28
    %56 = vmatmul.f32.gmra.mxu0 %v38
    %v57 = vpop.f32.mrf.mxu0
    %v58 = vadd.f32 %v34, %v57
    %59 = vdwg.mxu0
    %vm60 = vcmp.gt.f32.partialorder %v58, 0.0
    %v61 = vmin.f32 %v58, 0.0
    %v62 = vmul.f32 %v61, 1.442695
    %v63 = vpow.pop %v62
    %v64 = vsub.f32 %v63, 1.0
    %v65 = vmul.f32 %v64, 1.6732632
    %v66 = vsel %vm60, %v58, %v65
    %v67 = vmul.f32 %v66, 1.050701
    %v68 = vld [vmem:[%s3] sm:$0xff]
    %v69 = vld [vmem:[%s3 + $0x8] sm:$0xff]
    %v70 = vld [vmem:[%s3 + $0x10] sm:$0xff]
    %v71 = vld [vmem:[%s3 + $0x18] sm:$0xff]
    %v72 = vld [vmem:[%s3 + $0x20] sm:$0xff]
    %v73 = vld [vmem:[%s3 + $0x28] sm:$0xff]
    %v74 = vld [vmem:[%s3 + $0x30] sm:$0xff]
    %v75 = vld [vmem:[%s3 + $0x38] sm:$0xff]
    %v76 = vld [vmem:[%s4] sm:$0x1]
    %v78 = vperm.slane %v76, 0
    %vm80 = vcmask 523264
    %v82 = vsel %vm80, %v67, 0
    %84 = vmatpush.msra.mxu0 0.0
    %85 = vmatpush.msra.mxu0 0.0
    %86 = vmatpush.msra.mxu0 0.0
    %87 = vmatpush.msra.mxu0 0.0
    %88 = vmatpush.msra.mxu0 0.0
    %89 = vmatpush.msra.mxu0 0.0
    %90 = vmatpush.msra.mxu0 0.0
    %91 = vmatpush.msra.mxu0 0.0
    %92 = vmatpush.msra.mxu0 %v75
    %93 = vmatpush.msra.mxu0 %v74
    %94 = vmatpush.msra.mxu0 %v73
    %95 = vmatpush.msra.mxu0 %v72
    %96 = vmatpush.msra.mxu0 %v71
    %97 = vmatpush.msra.mxu0 %v70
    %98 = vmatpush.msra.mxu0 %v69
    %99 = vmatpush.msra.mxu0 %v68
    %100 = vmatmul.f32.gmra.mxu0 %v82
    %v101 = vpop.f32.mrf.mxu0
    %v102 = vadd.f32 %v78, %v101
    %103 = vdwg.mxu0
    %vm104 = vcmp.gt.f32.partialorder %v102, 0.0
    %v105 = vmin.f32 %v102, 0.0
    %v106 = vmul.f32 %v105, 1.442695
    %v107 = vpow.pop %v106
    %v108 = vsub.f32 %v107, 1.0
    %v109 = vmul.f32 %v108, 1.6732632
    %v110 = vsel %vm104, %v102, %v109
    %v111 = vmul.f32 %v110, 1.050701
    %v112 = vld [vmem:[%s5] sm:$0xff]
    %v113 = vld [vmem:[%s5 + $0x8] sm:$0xff]
    %v114 = vld [vmem:[%s5 + $0x10] sm:$0xff]
    %v115 = vld [vmem:[%s5 + $0x18] sm:$0xff]
    %v116 = vld [vmem:[%s6] sm:$0x1]
    %v118 = vperm.slane %v116, 0
    %v121 = vsel %vm36, %v111, 0
    %123 = vmatpush.msra.mxu0 0.0
    %124 = vmatpush.msra.mxu0 0.0
    %125 = vmatpush.msra.mxu0 0.0
    %126 = vmatpush.msra.mxu0 0.0
    %127 = vmatpush.msra.mxu0 0.0
    %128 = vmatpush.msra.mxu0 0.0
    %129 = vmatpush.msra.mxu0 0.0
    %130 = vmatpush.msra.mxu0 0.0
    %131 = vmatpush.msra.mxu0 0.0
    %132 = vmatpush.msra.mxu0 0.0
    %133 = vmatpush.msra.mxu0 0.0
    %134 = vmatpush.msra.mxu0 0.0
    %135 = vmatpush.msra.mxu0 %v115
    %136 = vmatpush.msra.mxu0 %v114
    %137 = vmatpush.msra.mxu0 %v113
    %138 = vmatpush.msra.mxu0 %v112
    %139 = vmatmul.f32.gmra.mxu0 %v121
    %v140 = vpop.f32.mrf.mxu0
    %v141 = vadd.f32 %v118, %v140
    %142 = vdwg.mxu0
    %vm143 = vcmp.gt.f32.partialorder %v141, 0.0
    %v144 = vmin.f32 %v141, 0.0
    %v145 = vmul.f32 %v144, 1.442695
    %v146 = vpow.pop %v145
    %v147 = vsub.f32 %v146, 1.0
    %v148 = vmul.f32 %v147, 1.6732632
    %v149 = vsel %vm143, %v141, %v148
    %v150 = vmul.f32 %v149, 1.050701
    %v151 = vlaneseq
    %v152 = vand.u32 %v151, 127
    %vm153 = vcmp.lt.s32.totalorder %v152, 10
    %v154 = vsel %vm153, %v150, -1e+30
    %155 = vmax.xlane.f32.xlu0 %v154
    %v156 = vpop.xlane.xlu0 %155
    %v157 = vsub.f32 %v154, %v156
    %v158 = vmul.f32 %v157, 1.442695
    %v159 = vpow.pop %v158
    %160 = vadd.xlane.f32.xlu0 %v159
    %v161 = vpop.xlane.xlu0 %160
    %v162 = vlog2.pop %v161
    %v163 = vmul.f32 %v162, 0.6931472
    %v164 = vsub.f32 %v157, %v163
    %vm165 = vcmask 80896
    %166 = vst.msk [vmem:[#allocation2] sm:$0xff] %vm165, %v164
    // Predicated region
    $region30: #{tpu_custom_call.1} parent=1 // pred_check
      _
    $region31: #{tpu_custom_call.1} parent=1 // pred_check_branch
      %168 = sbr.rel (0) target = $region33
    $region32: #{tpu_custom_call.1} parent=1 // pred_region
      %170 = vsyncadd [#allocation3], 0
      %s172 = sshll.u32 [#allocation2], 4
      %s173 = int_to_ptr.vmem [resolvable:$true] %s172
      %s174 = sshll.u32 %s7, 4
      %s175 = int_to_ptr.hbm [resolvable:$true] %s174
      %177 = dma.vmem_to_hbm [thread:$0]  %s173, 128, %s175, [#allocation3]
    $region33: #{tpu_custom_call.1} parent=1 // pred_fallthru
      _
    // Predicated region
    $region34: #{tpu_custom_call.1} parent=1 // pred_check
      _
    $region35: #{tpu_custom_call.1} parent=1 // pred_check_branch
      %179 = sbr.rel (0) target = $region37
    $region36: #{tpu_custom_call.1} parent=1 // pred_region
      %181 = dma.done [#allocation3], 128
    $region37: #{tpu_custom_call.1} parent=1 // pred_fallthru
      _
    %182 = vsyncpa [#allocation3], 1

</llo_original>
